<compile_context>
chip_gen: v7x
topology: tpu7x:2x2x1
jax: 0.10.0
libtpu: 0.0.40
codegen_flags: <defaults>
</compile_context>

<pallas_src>
import jax
import jax.numpy as jnp
from jax.experimental import pallas as pl
from jax.experimental.pallas import tpu as pltpu

# ---------------------------------------------------------------------------
# Model hyper-parameters (consistent with the module's __init__ defaults).
# ---------------------------------------------------------------------------
WIFI_DIM = 16
IBEACON_DIM = 10
OUTPUT_DIM = 32
HIDDEN_MAGN = 32
HIDDEN_WIFI = 64
HIDDEN_IBEACON = 64
IN_DIM = 6 + WIFI_DIM + IBEACON_DIM                              # 32
H1_DIM = 2 * (HIDDEN_MAGN + HIDDEN_WIFI + HIDDEN_IBEACON)        # 320
FEATURE_DIM = HIDDEN_MAGN + HIDDEN_WIFI + HIDDEN_IBEACON         # 160
BN_EPS = 1e-5


# ---------------------------------------------------------------------------
# Pallas kernel: fused forward pass for one batch tile (5 chained matmuls).
# ---------------------------------------------------------------------------
def _encoder_kernel(x_ref,
                    w1_ref, b1_ref,    # fused sub-encoder layer 1  [32,320]
                    w2_ref, b2_ref,    # fused sub-encoder layer 2  [320,160]
                    w3_ref, b3_ref,    # final encoder L1           [160,128]
                    w4_ref, b4_ref,    # final encoder L2           [128,64]
                    w5_ref, b5_ref,    # final encoder L3           [64,32]
                    o_ref):
    x = x_ref[...]                                                  # [TB, 32]

    # Sub-encoders: Linear -> BN(folded) -> Dropout(id) -> ReLU -> Linear,
    # all three branches fused via block-structured / block-diagonal weights.
    h1 = jnp.dot(x, w1_ref[...], preferred_element_type=jnp.float32) + b1_ref[...]
    h1 = jnp.maximum(h1, 0.0)                                       # [TB, 320]
    feat = jnp.dot(h1, w2_ref[...], preferred_element_type=jnp.float32) + b2_ref[...]
    # feat == concat([magn_out, wifi_out, ibeacon_out], axis=1)     # [TB, 160]

    # Final encoder: Linear -> BN -> Dropout -> ReLU, Linear -> BN -> ReLU, Linear
    h2 = jnp.dot(feat, w3_ref[...], preferred_element_type=jnp.float32) + b3_ref[...]
    h2 = jnp.maximum(h2, 0.0)                                       # [TB, 128]
    h3 = jnp.dot(h2, w4_ref[...], preferred_element_type=jnp.float32) + b4_ref[...]
    h3 = jnp.maximum(h3, 0.0)                                       # [TB, 64]
    o_ref[...] = jnp.dot(h3, w5_ref[...], preferred_element_type=jnp.float32) + b5_ref[...]


def _round_up(n, m):
    return ((n + m - 1) // m) * m


def encoder_forward(x, slabs, *, tile_b=512):
    """x: [B, IN_DIM] float32 -> [B, OUTPUT_DIM] float32."""
    B = x.shape[0]
    # Tile size: large for MXU utilization, shrink to the (8-aligned) batch for
    # small inputs; pad the tail with zero rows and slice the result back.
    tb = max(8, min(tile_b, _round_up(B, 8)))
    tb = _round_up(tb, 8)
    Bp = _round_up(B, tb)
    if Bp != B:
        x = jnp.pad(x, ((0, Bp - B), (0, 0)))

    ws = [slabs[k] for k in ("w1", "b1", "w2", "b2", "w3", "b3",
                             "w4", "b4", "w5", "b5")]

    x_spec = pl.BlockSpec((tb, IN_DIM), lambda i: (i, 0))
    w_specs = [pl.BlockSpec(w.shape, lambda i: (0, 0)) for w in ws]
    out_spec = pl.BlockSpec((tb, OUTPUT_DIM), lambda i: (i, 0))

    out = pl.pallas_call(
        _encoder_kernel,
        out_shape=jax.ShapeDtypeStruct((Bp, OUTPUT_DIM), jnp.float32),
        grid_spec=pltpu.PrefetchScalarGridSpec(
            num_scalar_prefetch=0,
            grid=(Bp // tb,),
            in_specs=[x_spec] + w_specs,
            out_specs=out_spec,
        ),
        compiler_params=pltpu.CompilerParams(
            dimension_semantics=("parallel",)),
    )(x, *ws)
    return out[:B] if Bp != B else out


# ---------------------------------------------------------------------------
# Deterministic parameter construction + BN folding (plain-JAX glue).
# ---------------------------------------------------------------------------
def _linear_params(key, fan_in, fan_out):
    # PyTorch nn.Linear default init: U(-1/sqrt(fan_in), 1/sqrt(fan_in)).
    kw, kb = jax.random.split(key)
    bound = 1.0 / jnp.sqrt(float(fan_in))
    w = jax.random.uniform(kw, (fan_in, fan_out), jnp.float32, -bound, bound)
    b = jax.random.uniform(kb, (fan_out,), jnp.float32, -bound, bound)
    return w, b


def _bn_params(key, dim):
    # Deterministic but non-trivial BN affine params / running statistics.
    k1, k2, k3 = jax.random.split(key, 3)
    gamma = 1.0 + 0.1 * jax.random.normal(k1, (dim,), jnp.float32)
    beta = 0.1 * jax.random.normal(k2, (dim,), jnp.float32)
    mean = 0.05 * jax.random.normal(k3, (dim,), jnp.float32)
    var = jnp.ones((dim,), jnp.float32)
    return gamma, beta, mean, var


def _fold_bn(w, b, gamma, beta, mean, var, eps=BN_EPS):
    # BN(eval) after Linear  ==  Linear with scaled weight / shifted bias.
    s = gamma / jnp.sqrt(var + eps)
    return w * s[None, :], (b - mean) * s + beta


def make_params(key):
    """Raw (BN-folded) per-branch parameters, matching the PyTorch layout."""
    keys = jax.random.split(key, 16)
    p = {}

    def build_sub(kw1, kbn, kw2, in_dim, hidden):
        w1, b1 = _linear_params(kw1, in_dim, hidden * 2)
        g, be, mu, var = _bn_params(kbn, hidden * 2)
        w1f, b1f = _fold_bn(w1, b1, g, be, mu, var)
        w2, b2 = _linear_params(kw2, hidden * 2, hidden)
        return w1f, b1f.reshape(1, -1), w2, b2.reshape(1, -1)

    p["wm1"], p["bm1"], p["wm2"], p["bm2"] = build_sub(
        keys[0], keys[1], keys[2], 4, HIDDEN_MAGN)
    p["ww1"], p["bw1"], p["ww2"], p["bw2"] = build_sub(
        keys[3], keys[4], keys[5], WIFI_DIM + 1, HIDDEN_WIFI)
    p["wi1"], p["bi1"], p["wi2"], p["bi2"] = build_sub(
        keys[6], keys[7], keys[8], IBEACON_DIM + 1, HIDDEN_IBEACON)

    # Final encoder: Linear->BN->Dropout->ReLU, Linear->BN->ReLU, Linear.
    w1, b1 = _linear_params(keys[9], FEATURE_DIM, OUTPUT_DIM * 4)
    g1, be1, m1, v1 = _bn_params(keys[10], OUTPUT_DIM * 4)
    we1, be1f = _fold_bn(w1, b1, g1, be1, m1, v1)
    w2, b2 = _linear_params(keys[11], OUTPUT_DIM * 4, OUTPUT_DIM * 2)
    g2, be2, m2, v2 = _bn_params(keys[12], OUTPUT_DIM * 2)
    we2, be2f = _fold_bn(w2, b2, g2, be2, m2, v2)
    w3, b3 = _linear_params(keys[13], OUTPUT_DIM * 2, OUTPUT_DIM)

    p["we1"], p["be1"] = we1, be1f.reshape(1, -1)
    p["we2"], p["be2"] = we2, be2f.reshape(1, -1)
    p["we3"], p["be3"] = w3, b3.reshape(1, -1)
    return p


def build_slabs(p):
    """Fuse branch weights into block-structured / block-diagonal slabs (once,
    outside the kernel). Column order matches torch.cat([magn, wifi, ibeacon])."""
    # --- Layer-1 slab: [IN_DIM, 320]. Rows = input features, cols = branch hidden.
    w1 = jnp.zeros((IN_DIM, H1_DIM), jnp.float32)
    w1 = w1.at[0:4, 0:64].set(p["wm1"])                          # magn: x[:, :4]
    w1 = w1.at[4, 64:192].set(p["ww1"][0])                       # wifi: x[:, 4]
    w1 = w1.at[6:6 + WIFI_DIM, 64:192].set(p["ww1"][1:])         # wifi: x[:, 6:22]
    w1 = w1.at[5, 192:320].set(p["wi1"][0])                      # ib:   x[:, 5]
    w1 = w1.at[6 + WIFI_DIM:IN_DIM, 192:320].set(p["wi1"][1:])   # ib:   x[:, 22:32]
    b1 = jnp.concatenate([p["bm1"], p["bw1"], p["bi1"]], axis=1)  # [1, 320]

    # --- Layer-2 slab: block-diagonal [320, 160] -> produces feat directly.
    w2 = jnp.zeros((H1_DIM, FEATURE_DIM), jnp.float32)
    w2 = w2.at[0:64, 0:32].set(p["wm2"])
    w2 = w2.at[64:192, 32:96].set(p["ww2"])
    w2 = w2.at[192:320, 96:160].set(p["wi2"])
    b2 = jnp.concatenate([p["bm2"], p["bw2"], p["bi2"]], axis=1)  # [1, 160]

    return dict(w1=w1, b1=b1, w2=w2, b2=b2,
                w3=p["we1"], b3=p["be1"],
                w4=p["we2"], b4=p["be2"],
                w5=p["we3"], b5=p["be3"])


# ---------------------------------------------------------------------------
# Pure-JAX reference (unfused, same math as the PyTorch forward in eval mode).
# ---------------------------------------------------------------------------
def reference_forward(x, p):
    def sub(inp, w1, b1, w2, b2):
        h = jnp.maximum(inp @ w1 + b1, 0.0)
        return h @ w2 + b2

    magn = sub(x[:, :4], p["wm1"], p["bm1"], p["wm2"], p["bm2"])
    wifi_in = jnp.concatenate([x[:, 4:5], x[:, 6:6 + WIFI_DIM]], axis=1)
    wifi = sub(wifi_in, p["ww1"], p["bw1"], p["ww2"], p["bw2"])
    ib_in = jnp.concatenate(
        [x[:, 5:6], x[:, 6 + WIFI_DIM:6 + WIFI_DIM + IBEACON_DIM]], axis=1)
    ib = sub(ib_in, p["wi1"], p["bi1"], p["wi2"], p["bi2"])
    feat = jnp.concatenate([magn, wifi, ib], axis=1)
    h1 = jnp.maximum(feat @ p["we1"] + p["be1"], 0.0)
    h2 = jnp.maximum(h1 @ p["we2"] + p["be2"], 0.0)
    return h2 @ p["we3"] + p["be3"]


if __name__ == "__main__":
    key = jax.random.PRNGKey(0)
    kx1, kx2, kp = jax.random.split(key, 3)

    params = make_params(kp)
    slabs = build_slabs(params)

    # Case 1: small batch, divides the (shrunk) tile evenly.
    B1 = 64
    x1 = jax.random.normal(kx1, (B1, IN_DIM), jnp.float32)
    out1 = jax.block_until_ready(encoder_forward(x1, slabs))
    ref1 = reference_forward(x1, params)
    assert out1.shape == (B1, OUTPUT_DIM)
    assert jnp.allclose(out1, ref1, atol=2e-4, rtol=2e-4), "mismatch (B=64)"

    # Case 2: batch not a multiple of 8 -> exercises pad/slice tail handling.
    B2 = 100
    x2 = jax.random.normal(kx2, (B2, IN_DIM), jnp.float32)
    out2 = jax.block_until_ready(encoder_forward(x2, slabs))
    ref2 = reference_forward(x2, params)
    assert out2.shape == (B2, OUTPUT_DIM)
    assert jnp.allclose(out2, ref2, atol=2e-4, rtol=2e-4), "mismatch (B=100)"

    print("KERNEL_OK")
</pallas_src>

<mosaic_0001>
module attributes {stable_mosaic.version = 11 : i64} {
  func.func @_encoder_kernel(%arg0: i32, %arg1: memref<64x32xf32, #tpu.memory_space<vmem>>, %arg2: memref<32x320xf32, #tpu.memory_space<vmem>>, %arg3: memref<1x320xf32, #tpu.memory_space<vmem>>, %arg4: memref<320x160xf32, #tpu.memory_space<vmem>>, %arg5: memref<1x160xf32, #tpu.memory_space<vmem>>, %arg6: memref<160x128xf32, #tpu.memory_space<vmem>>, %arg7: memref<1x128xf32, #tpu.memory_space<vmem>>, %arg8: memref<128x64xf32, #tpu.memory_space<vmem>>, %arg9: memref<1x64xf32, #tpu.memory_space<vmem>>, %arg10: memref<64x32xf32, #tpu.memory_space<vmem>>, %arg11: memref<1x32xf32, #tpu.memory_space<vmem>>, %arg12: memref<64x32xf32, #tpu.memory_space<vmem>>) attributes {dimension_semantics = [#tpu.dimension_semantics<parallel>], iteration_bounds = array<i64: 1>, scalar_prefetch = 0 : i64, scratch_operands = 0 : i64, tpu.core_type = #tpu.core_type<tc>, window_params = [{transform_indices = @transform_0, window_bounds = array<i64: 64, 32>}, {pipeline_mode = #tpu.pipeline_mode<synchronous>, transform_indices = @transform_1, window_bounds = array<i64: 32, 320>}, {pipeline_mode = #tpu.pipeline_mode<synchronous>, transform_indices = @transform_2, window_bounds = array<i64: 1, 320>}, {pipeline_mode = #tpu.pipeline_mode<synchronous>, transform_indices = @transform_3, window_bounds = array<i64: 320, 160>}, {pipeline_mode = #tpu.pipeline_mode<synchronous>, transform_indices = @transform_4, window_bounds = array<i64: 1, 160>}, {pipeline_mode = #tpu.pipeline_mode<synchronous>, transform_indices = @transform_5, window_bounds = array<i64: 160, 128>}, {pipeline_mode = #tpu.pipeline_mode<synchronous>, transform_indices = @transform_6, window_bounds = array<i64: 1, 128>}, {pipeline_mode = #tpu.pipeline_mode<synchronous>, transform_indices = @transform_7, window_bounds = array<i64: 128, 64>}, {pipeline_mode = #tpu.pipeline_mode<synchronous>, transform_indices = @transform_8, window_bounds = array<i64: 1, 64>}, {pipeline_mode = #tpu.pipeline_mode<synchronous>, transform_indices = @transform_9, window_bounds = array<i64: 64, 32>}, {pipeline_mode = #tpu.pipeline_mode<synchronous>, transform_indices = @transform_10, window_bounds = array<i64: 1, 32>}, {transform_indices = @transform_11, window_bounds = array<i64: 64, 32>}]} {
    %c0 = arith.constant 0 : index
    %c0_0 = arith.constant 0 : index
    %0 = vector.load %arg1[%c0, %c0_0] : memref<64x32xf32, #tpu.memory_space<vmem>>, vector<64x32xf32>
    %c0_1 = arith.constant 0 : index
    %c0_2 = arith.constant 0 : index
    %1 = vector.load %arg2[%c0_1, %c0_2] : memref<32x320xf32, #tpu.memory_space<vmem>>, vector<32x320xf32>
    %cst = arith.constant dense<0.000000e+00> : vector<64x320xf32>
    %2 = tpu.matmul %0, %1, %cst {dimension_numbers = #tpu.dot_dimension_numbers<[1], [0], [0], [1], [0, 0, 1, 1], [], []>} : vector<64x32xf32>, vector<32x320xf32>, vector<64x320xf32> -> vector<64x320xf32>
    %c0_3 = arith.constant 0 : index
    %c0_4 = arith.constant 0 : index
    %3 = vector.load %arg3[%c0_3, %c0_4] : memref<1x320xf32, #tpu.memory_space<vmem>>, vector<1x320xf32>
    %4 = vector.broadcast %3 : vector<1x320xf32> to vector<64x320xf32>
    %5 = arith.addf %2, %4 : vector<64x320xf32>
    %cst_5 = arith.constant 0.000000e+00 : f32
    %6 = vector.broadcast %cst_5 : f32 to vector<64x320xf32>
    %7 = arith.maximumf %5, %6 : vector<64x320xf32>
    %c0_6 = arith.constant 0 : index
    %c0_7 = arith.constant 0 : index
    %8 = vector.load %arg4[%c0_6, %c0_7] : memref<320x160xf32, #tpu.memory_space<vmem>>, vector<320x160xf32>
    %cst_8 = arith.constant dense<0.000000e+00> : vector<64x160xf32>
    %9 = tpu.matmul %7, %8, %cst_8 {dimension_numbers = #tpu.dot_dimension_numbers<[1], [0], [0], [1], [0, 0, 1, 1], [], []>} : vector<64x320xf32>, vector<320x160xf32>, vector<64x160xf32> -> vector<64x160xf32>
    %c0_9 = arith.constant 0 : index
    %c0_10 = arith.constant 0 : index
    %10 = vector.load %arg5[%c0_9, %c0_10] : memref<1x160xf32, #tpu.memory_space<vmem>>, vector<1x160xf32>
    %11 = vector.broadcast %10 : vector<1x160xf32> to vector<64x160xf32>
    %12 = arith.addf %9, %11 : vector<64x160xf32>
    %c0_11 = arith.constant 0 : index
    %c0_12 = arith.constant 0 : index
    %13 = vector.load %arg6[%c0_11, %c0_12] : memref<160x128xf32, #tpu.memory_space<vmem>>, vector<160x128xf32>
    %cst_13 = arith.constant dense<0.000000e+00> : vector<64x128xf32>
    %14 = tpu.matmul %12, %13, %cst_13 {dimension_numbers = #tpu.dot_dimension_numbers<[1], [0], [0], [1], [0, 0, 1, 1], [], []>} : vector<64x160xf32>, vector<160x128xf32>, vector<64x128xf32> -> vector<64x128xf32>
    %c0_14 = arith.constant 0 : index
    %c0_15 = arith.constant 0 : index
    %15 = vector.load %arg7[%c0_14, %c0_15] : memref<1x128xf32, #tpu.memory_space<vmem>>, vector<1x128xf32>
    %16 = vector.broadcast %15 : vector<1x128xf32> to vector<64x128xf32>
    %17 = arith.addf %14, %16 : vector<64x128xf32>
    %cst_16 = arith.constant 0.000000e+00 : f32
    %18 = vector.broadcast %cst_16 : f32 to vector<64x128xf32>
    %19 = arith.maximumf %17, %18 : vector<64x128xf32>
    %c0_17 = arith.constant 0 : index
    %c0_18 = arith.constant 0 : index
    %20 = vector.load %arg8[%c0_17, %c0_18] : memref<128x64xf32, #tpu.memory_space<vmem>>, vector<128x64xf32>
    %cst_19 = arith.constant dense<0.000000e+00> : vector<64x64xf32>
    %21 = tpu.matmul %19, %20, %cst_19 {dimension_numbers = #tpu.dot_dimension_numbers<[1], [0], [0], [1], [0, 0, 1, 1], [], []>} : vector<64x128xf32>, vector<128x64xf32>, vector<64x64xf32> -> vector<64x64xf32>
    %c0_20 = arith.constant 0 : index
    %c0_21 = arith.constant 0 : index
    %22 = vector.load %arg9[%c0_20, %c0_21] : memref<1x64xf32, #tpu.memory_space<vmem>>, vector<1x64xf32>
    %23 = vector.broadcast %22 : vector<1x64xf32> to vector<64x64xf32>
    %24 = arith.addf %21, %23 : vector<64x64xf32>
    %cst_22 = arith.constant 0.000000e+00 : f32
    %25 = vector.broadcast %cst_22 : f32 to vector<64x64xf32>
    %26 = arith.maximumf %24, %25 : vector<64x64xf32>
    %c0_23 = arith.constant 0 : index
    %c0_24 = arith.constant 0 : index
    %27 = vector.load %arg10[%c0_23, %c0_24] : memref<64x32xf32, #tpu.memory_space<vmem>>, vector<64x32xf32>
    %cst_25 = arith.constant dense<0.000000e+00> : vector<64x32xf32>
    %28 = tpu.matmul %26, %27, %cst_25 {dimension_numbers = #tpu.dot_dimension_numbers<[1], [0], [0], [1], [0, 0, 1, 1], [], []>} : vector<64x64xf32>, vector<64x32xf32>, vector<64x32xf32> -> vector<64x32xf32>
    %c0_26 = arith.constant 0 : index
    %c0_27 = arith.constant 0 : index
    %29 = vector.load %arg11[%c0_26, %c0_27] : memref<1x32xf32, #tpu.memory_space<vmem>>, vector<1x32xf32>
    %30 = vector.broadcast %29 : vector<1x32xf32> to vector<64x32xf32>
    %31 = arith.addf %28, %30 : vector<64x32xf32>
    %c0_28 = arith.constant 0 : index
    %c0_29 = arith.constant 0 : index
    %32 = vector.load %arg12[%c0_28, %c0_29] : memref<64x32xf32, #tpu.memory_space<vmem>>, vector<64x32xf32>
    tpu.vector_store %arg12[%c0_28, %c0_29], %31 {strides = array<i32>} : memref<64x32xf32, #tpu.memory_space<vmem>>, vector<64x32xf32>,
    return
  }
  func.func @transform_0(%arg0: i32) -> (i32, i32) {
    %c0_i32 = arith.constant 0 : i32
    %c0_i32_0 = arith.constant 0 : i32
    return %arg0, %c0_i32 : i32, i32
  }
  func.func @transform_1(%arg0: i32) -> (i32, i32) {
    %c0_i32 = arith.constant 0 : i32
    %c0_i32_0 = arith.constant 0 : i32
    %c0_i32_1 = arith.constant 0 : i32
    return %c0_i32, %c0_i32_0 : i32, i32
  }
  func.func @transform_2(%arg0: i32) -> (i32, i32) {
    %c0_i32 = arith.constant 0 : i32
    %c0_i32_0 = arith.constant 0 : i32
    %c0_i32_1 = arith.constant 0 : i32
    return %c0_i32, %c0_i32_0 : i32, i32
  }
  func.func @transform_3(%arg0: i32) -> (i32, i32) {
    %c0_i32 = arith.constant 0 : i32
    %c0_i32_0 = arith.constant 0 : i32
    %c0_i32_1 = arith.constant 0 : i32
    return %c0_i32, %c0_i32_0 : i32, i32
  }
  func.func @transform_4(%arg0: i32) -> (i32, i32) {
    %c0_i32 = arith.constant 0 : i32
    %c0_i32_0 = arith.constant 0 : i32
    %c0_i32_1 = arith.constant 0 : i32
    return %c0_i32, %c0_i32_0 : i32, i32
  }
  func.func @transform_5(%arg0: i32) -> (i32, i32) {
    %c0_i32 = arith.constant 0 : i32
    %c0_i32_0 = arith.constant 0 : i32
    %c0_i32_1 = arith.constant 0 : i32
    return %c0_i32, %c0_i32_0 : i32, i32
  }
  func.func @transform_6(%arg0: i32) -> (i32, i32) {
    %c0_i32 = arith.constant 0 : i32
    %c0_i32_0 = arith.constant 0 : i32
    %c0_i32_1 = arith.constant 0 : i32
    return %c0_i32, %c0_i32_0 : i32, i32
  }
  func.func @transform_7(%arg0: i32) -> (i32, i32) {
    %c0_i32 = arith.constant 0 : i32
    %c0_i32_0 = arith.constant 0 : i32
    %c0_i32_1 = arith.constant 0 : i32
    return %c0_i32, %c0_i32_0 : i32, i32
  }
  func.func @transform_8(%arg0: i32) -> (i32, i32) {
    %c0_i32 = arith.constant 0 : i32
    %c0_i32_0 = arith.constant 0 : i32
    %c0_i32_1 = arith.constant 0 : i32
    return %c0_i32, %c0_i32_0 : i32, i32
  }
  func.func @transform_9(%arg0: i32) -> (i32, i32) {
    %c0_i32 = arith.constant 0 : i32
    %c0_i32_0 = arith.constant 0 : i32
    %c0_i32_1 = arith.constant 0 : i32
    return %c0_i32, %c0_i32_0 : i32, i32
  }
  func.func @transform_10(%arg0: i32) -> (i32, i32) {
    %c0_i32 = arith.constant 0 : i32
    %c0_i32_0 = arith.constant 0 : i32
    %c0_i32_1 = arith.constant 0 : i32
    return %c0_i32, %c0_i32_0 : i32, i32
  }
  func.func @transform_11(%arg0: i32) -> (i32, i32) {
    %c0_i32 = arith.constant 0 : i32
    %c0_i32_0 = arith.constant 0 : i32
    return %arg0, %c0_i32 : i32, i32
  }
}

</mosaic_0001>

<llo_original>
// kernel: tpu_custom_call.1
$region0: #{tpu_custom_call.1}
  #allocation0 [shape = 'u32[]', space=smem, size = 0x4, offset = 0x4, fixed_abs, tag = 'smem constant byte address 0x4 - core index']
  #allocation1 [shape = 'u32[144,128]{1,0:T(1,128)}', space=vmem, size = 0x12000, scoped, tag = 'internal scratch']
  %s0 = inlined_call_operand.vmem [shape: f32[64,32], index: 0, kind: input, shape index: {}]
  %s1 = inlined_call_operand.vmem [shape: f32[32,320], index: 1, kind: input, shape index: {}]
  %s2 = inlined_call_operand.vmem [shape: f32[1,320], index: 2, kind: input, shape index: {}]
  %s3 = inlined_call_operand.vmem [shape: f32[320,160], index: 3, kind: input, shape index: {}]
  %s4 = inlined_call_operand.vmem [shape: f32[1,160], index: 4, kind: input, shape index: {}]
  %s5 = inlined_call_operand.vmem [shape: f32[160,128], index: 5, kind: input, shape index: {}]
  %s6 = inlined_call_operand.vmem [shape: f32[1,128], index: 6, kind: input, shape index: {}]
  %s7 = inlined_call_operand.vmem [shape: f32[128,64], index: 7, kind: input, shape index: {}]
  %s8 = inlined_call_operand.vmem [shape: f32[1,64], index: 8, kind: input, shape index: {}]
  %s9 = inlined_call_operand.vmem [shape: f32[64,32], index: 9, kind: input, shape index: {}]
  %s10 = inlined_call_operand.vmem [shape: f32[1,32], index: 10, kind: input, shape index: {}]
  %s11 = inlined_call_operand.vmem [shape: f32[64,32], index: 11, kind: output, shape index: {}]
  %s12 = sld [smem:[#allocation0]]
  $region54: #{tpu_custom_call.1} parent=0
    _
  %s14 = ssub.s32 1, %s12
  %s15 = scalar_select 0, %s14, %s12
  // Predicated region
  $region2: #{tpu_custom_call.1} parent=0 // pred_check
    _
  $region3: #{tpu_custom_call.1} parent=0 // pred_check_branch
    %17 = sbr.rel (0) target = $region5
  $region4: #{tpu_custom_call.1} parent=0 // pred_region
    _
  $region5: #{tpu_custom_call.1} parent=0 // pred_fallthru
    _
  // Predicated region
  $region6: #{tpu_custom_call.1} parent=0 // pred_check
    _
  $region7: #{tpu_custom_call.1} parent=0 // pred_check_branch
    %19 = sbr.rel (0) target = $region9
  $region8: #{tpu_custom_call.1} parent=0 // pred_region
    _
  $region9: #{tpu_custom_call.1} parent=0 // pred_fallthru
    _
  // Predicated region
  $region10: #{tpu_custom_call.1} parent=0 // pred_check
    _
  $region11: #{tpu_custom_call.1} parent=0 // pred_check_branch
    %21 = sbr.rel (0) target = $region13
  $region12: #{tpu_custom_call.1} parent=0 // pred_region
    _
  $region13: #{tpu_custom_call.1} parent=0 // pred_fallthru
    _
  // Predicated region
  $region14: #{tpu_custom_call.1} parent=0 // pred_check
    _
  $region15: #{tpu_custom_call.1} parent=0 // pred_check_branch
    %23 = sbr.rel (0) target = $region17
  $region16: #{tpu_custom_call.1} parent=0 // pred_region
    _
  $region17: #{tpu_custom_call.1} parent=0 // pred_fallthru
    _
  // Predicated region
  $region18: #{tpu_custom_call.1} parent=0 // pred_check
    _
  $region19: #{tpu_custom_call.1} parent=0 // pred_check_branch
    %25 = sbr.rel (0) target = $region21
  $region20: #{tpu_custom_call.1} parent=0 // pred_region
    _
  $region21: #{tpu_custom_call.1} parent=0 // pred_fallthru
    _
  // Predicated region
  $region22: #{tpu_custom_call.1} parent=0 // pred_check
    _
  $region23: #{tpu_custom_call.1} parent=0 // pred_check_branch
    %27 = sbr.rel (0) target = $region25
  $region24: #{tpu_custom_call.1} parent=0 // pred_region
    _
  $region25: #{tpu_custom_call.1} parent=0 // pred_fallthru
    _
  // Predicated region
  $region26: #{tpu_custom_call.1} parent=0 // pred_check
    _
  $region27: #{tpu_custom_call.1} parent=0 // pred_check_branch
    %29 = sbr.rel (0) target = $region29
  $region28: #{tpu_custom_call.1} parent=0 // pred_region
    _
  $region29: #{tpu_custom_call.1} parent=0 // pred_fallthru
    _
  // Predicated region
  $region30: #{tpu_custom_call.1} parent=0 // pred_check
    _
  $region31: #{tpu_custom_call.1} parent=0 // pred_check_branch
    %31 = sbr.rel (0) target = $region33
  $region32: #{tpu_custom_call.1} parent=0 // pred_region
    _
  $region33: #{tpu_custom_call.1} parent=0 // pred_fallthru
    _
  // Predicated region
  $region34: #{tpu_custom_call.1} parent=0 // pred_check
    _
  $region35: #{tpu_custom_call.1} parent=0 // pred_check_branch
    %33 = sbr.rel (0) target = $region37
  $region36: #{tpu_custom_call.1} parent=0 // pred_region
    _
  $region37: #{tpu_custom_call.1} parent=0 // pred_fallthru
    _
  // Predicated region
  $region38: #{tpu_custom_call.1} parent=0 // pred_check
    _
  $region39: #{tpu_custom_call.1} parent=0 // pred_check_branch
    %35 = sbr.rel (0) target = $region41
  $region40: #{tpu_custom_call.1} parent=0 // pred_region
    _
  $region41: #{tpu_custom_call.1} parent=0 // pred_fallthru
    _
  // Predicated region
  $region42: #{tpu_custom_call.1} parent=0 // pred_check
    _
  $region43: #{tpu_custom_call.1} parent=0 // pred_check_branch
    %37 = sbr.rel (0) target = $region45
  $region44: #{tpu_custom_call.1} parent=0 // pred_region
    _
  $region45: #{tpu_custom_call.1} parent=0 // pred_fallthru
    _
  %v38 = vld [vmem:[%s0] sm:$0xff]
  %v39 = vld [vmem:[%s0 + $0x8] sm:$0xff]
  %v40 = vld [vmem:[%s0 + $0x10] sm:$0xff]
  %v41 = vld [vmem:[%s0 + $0x18] sm:$0xff]
  %v42 = vld [vmem:[%s0 + $0x20] sm:$0xff]
  %v43 = vld [vmem:[%s0 + $0x28] sm:$0xff]
  %v44 = vld [vmem:[%s0 + $0x30] sm:$0xff]
  %v45 = vld [vmem:[%s0 + $0x38] sm:$0xff]
  %v46 = vld [vmem:[%s1] sm:$0xff]
  %v47 = vld [vmem:[%s1 + $0x8] sm:$0xff]
  %v48 = vld [vmem:[%s1 + $0x10] sm:$0xff]
  %v49 = vld [vmem:[%s1 + $0x18] sm:$0xff]
  %v50 = vld [vmem:[%s1 + $0x20] sm:$0xff]
  %v51 = vld [vmem:[%s1 + $0x28] sm:$0xff]
  %v52 = vld [vmem:[%s1 + $0x30] sm:$0xff]
  %v53 = vld [vmem:[%s1 + $0x38] sm:$0xff]
  %v54 = vld [vmem:[%s1 + $0x40] sm:$0xff]
  %v55 = vld [vmem:[%s1 + $0x48] sm:$0xff]
  %v56 = vld [vmem:[%s1 + $0x50] sm:$0xff]
  %v57 = vld [vmem:[%s1 + $0x58] sm:$0xff]
  %v58 = vld [vmem:[%s2] sm:$0x7]
  %v60 = vlaneseq
  %v61 = vshrl.u32 %v60, 7
  %v62 = vsub.s32 0, %v61
  %v63 = vrot.slane %v58, %v62
  %v64 = vlaneseq
  %v65 = vshrl.u32 %v64, 7
  %v66 = vsub.s32 1, %v65
  %v67 = vrot.slane %v58, %v66
  %v68 = vlaneseq
  %v69 = vshrl.u32 %v68, 7
  %v70 = vsub.s32 2, %v69
  %v71 = vrot.slane %v58, %v70
  %vm75 = vcmask 261120
  %v77 = vsel %vm75, %v38, 0
  %v80 = vsel %vm75, %v39, 0
  %v83 = vsel %vm75, %v40, 0
  %v86 = vsel %vm75, %v41, 0
  %v89 = vsel %vm75, %v42, 0
  %v92 = vsel %vm75, %v43, 0
  %v95 = vsel %vm75, %v44, 0
  %v98 = vsel %vm75, %v45, 0
  %100 = vmatprep.subr.mxu0 %v47
  %101 = vmatpush1.msra.mxu0 %v46
  %102 = vmatprep.subr.mxu0 %v50
  %103 = vmatpush1.msra.mxu0 %v49
  %104 = vmatprep.subr.mxu0 %v53
  %105 = vmatpush1.msra.mxu0 %v52
  %106 = vmatprep.subr.mxu0 %v56
  %107 = vmatpush1.msra.mxu0 %v55
  %108 = vmatprep.subr.mxu0 0.0
  %109 = vmatpush1.msra.mxu0 0.0
  %110 = vmatprep.subr.mxu0 0.0
  %111 = vmatpush1.msra.mxu0 0.0
  %112 = vmatprep.subr.mxu0 0.0
  %113 = vmatpush1.msra.mxu0 0.0
  %114 = vmatprep.subr.mxu0 0.0
  %115 = vmatpush1.msra.mxu0 0.0
  %116 = vmatprep.subr.mxu0 0.0
  %117 = vmatpush1.msra.mxu0 0.0
  %118 = vmatprep.subr.mxu0 0.0
  %119 = vmatpush1.msra.mxu0 0.0
  %120 = vmatprep.subr.mxu0 0.0
  %121 = vmatpush1.msra.mxu0 0.0
  %122 = vmatprep.subr.mxu0 0.0
  %123 = vmatpush1.msra.mxu0 0.0
  %124 = vmatprep.subr.mxu0 0.0
  %125 = vmatpush1.msra.mxu0 0.0
  %126 = vmatprep.subr.mxu0 0.0
  %127 = vmatpush1.msra.mxu0 0.0
  %128 = vmatprep.subr.mxu0 0.0
  %129 = vmatpush1.msra.mxu0 0.0
  %130 = vmatprep.subr.mxu0 0.0
  %131 = vmatpush1.msra.mxu0 0.0
  %132 = vmatprep.subr.mxu0 0.0
  %133 = vmatpush1.msra.mxu0 0.0
  %134 = vmatprep.subr.mxu0 0.0
  %135 = vmatpush1.msra.mxu0 0.0
  %136 = vmatprep.subr.mxu0 0.0
  %137 = vmatpush1.msra.mxu0 0.0
  %138 = vmatprep.subr.mxu0 0.0
  %139 = vmatpush1.msra.mxu0 0.0
  %140 = vmatprep.subr.mxu0 0.0
  %141 = vmatpush1.msra.mxu0 0.0
  %142 = vmatprep.subr.mxu0 0.0
  %143 = vmatpush1.msra.mxu0 0.0
  %144 = vmatprep.subr.mxu0 0.0
  %145 = vmatpush1.msra.mxu0 0.0
  %146 = vmatprep.subr.mxu0 0.0
  %147 = vmatpush1.msra.mxu0 0.0
  %148 = vmatprep.subr.mxu0 0.0
  %149 = vmatpush1.msra.mxu0 0.0
  %150 = vmatprep.subr.mxu0 0.0
  %151 = vmatpush1.msra.mxu0 0.0
  %152 = vmatprep.subr.mxu0 0.0
  %153 = vmatpush1.msra.mxu0 0.0
  %154 = vmatprep.subr.mxu0 0.0
  %155 = vmatpush1.msra.mxu0 0.0
  %156 = vmatprep.subr.mxu0 0.0
  %157 = vmatpush1.msra.mxu0 0.0
  %158 = vmatprep.subr.mxu0 0.0
  %159 = vmatpush1.msra.mxu0 0.0
  %160 = vmatprep.subr.mxu0 0.0
  %161 = vmatpush1.msra.mxu0 0.0
  %162 = vmatprep.subr.mxu0 0.0
  %163 = vmatpush1.msra.mxu0 0.0
  %164 = vmatprep.mubr.f32.mxu0 0.0
  %165 = vmatmul.mubr.f32.gmra.mrb[0].mxu0 %v77
  %v166 = vpop.f32.mrb[0].mxu0
  %v167 = vadd.f32 %v63, %v166
  %v168 = vpop.f32.mrb[0].mxu0
  %v169 = vadd.f32 %v67, %v168
  %170 = vmatprep.mubr.f32.mxu0 0.0
  %171 = vmatmul.mubr.f32.gmra.mrb[0].mxu0 %v80
  %v172 = vpop.f32.mrb[0].mxu0
  %v173 = vadd.f32 %v63, %v172
  %v174 = vpop.f32.mrb[0].mxu0
  %v175 = vadd.f32 %v67, %v174
  %176 = vmatprep.mubr.f32.mxu0 0.0
  %177 = vmatmul.mubr.f32.gmra.mrb[0].mxu0 %v83
  %v178 = vpop.f32.mrb[0].mxu0
  %v179 = vadd.f32 %v63, %v178
  %v180 = vpop.f32.mrb[0].mxu0
  %v181 = vadd.f32 %v67, %v180
  %182 = vmatprep.mubr.f32.mxu0 0.0
  %183 = vmatmul.mubr.f32.gmra.mrb[0].mxu0 %v86
  %v184 = vpop.f32.mrb[0].mxu0
  %v185 = vadd.f32 %v63, %v184
  %v186 = vpop.f32.mrb[0].mxu0
  %v187 = vadd.f32 %v67, %v186
  %188 = vmatprep.mubr.f32.mxu0 0.0
  %189 = vmatmul.mubr.f32.gmra.mrb[0].mxu0 %v89
  %v190 = vpop.f32.mrb[0].mxu0
  %v191 = vadd.f32 %v63, %v190
  %v192 = vpop.f32.mrb[0].mxu0
  %v193 = vadd.f32 %v67, %v192
  %194 = vmatprep.mubr.f32.mxu0 0.0
  %195 = vmatmul.mubr.f32.gmra.mrb[0].mxu0 %v92
  %v196 = vpop.f32.mrb[0].mxu0
  %v197 = vadd.f32 %v63, %v196
  %v198 = vpop.f32.mrb[0].mxu0
  %v199 = vadd.f32 %v67, %v198
  %200 = vmatprep.mubr.f32.mxu0 0.0
  %201 = vmatmul.mubr.f32.gmra.mrb[0].mxu0 %v95
  %v202 = vpop.f32.mrb[0].mxu0
  %v203 = vadd.f32 %v63, %v202
  %v204 = vpop.f32.mrb[0].mxu0
  %v205 = vadd.f32 %v67, %v204
  %206 = vmatprep.mubr.f32.mxu0 0.0
  %207 = vmatmul.mubr.f32.gmra.mrb[0].mxu0 %v98
  %v208 = vpop.f32.mrb[0].mxu0
  %v209 = vadd.f32 %v63, %v208
  %v210 = vpop.f32.mrb[0].mxu0
  %v211 = vadd.f32 %v67, %v210
  %212 = vdwg.mxu0
  %213 = vmatprep.subr.mxu0 0.0
  %214 = vmatpush1.msra.mxu0 %v48
  %215 = vmatprep.subr.mxu0 0.0
  %216 = vmatpush1.msra.mxu0 %v51
  %217 = vmatprep.subr.mxu0 0.0
  %218 = vmatpush1.msra.mxu0 %v54
  %219 = vmatprep.subr.mxu0 0.0
  %220 = vmatpush1.msra.mxu0 %v57
  %221 = vmatprep.subr.mxu0 0.0
  %222 = vmatpush1.msra.mxu0 0.0
  %223 = vmatprep.subr.mxu0 0.0
  %224 = vmatpush1.msra.mxu0 0.0
  %225 = vmatprep.subr.mxu0 0.0
  %226 = vmatpush1.msra.mxu0 0.0
  %227 = vmatprep.subr.mxu0 0.0
  %228 = vmatpush1.msra.mxu0 0.0
  %229 = vmatprep.subr.mxu0 0.0
  %230 = vmatpush1.msra.mxu0 0.0
  %231 = vmatprep.subr.mxu0 0.0
  %232 = vmatpush1.msra.mxu0 0.0
  %233 = vmatprep.subr.mxu0 0.0
  %234 = vmatpush1.msra.mxu0 0.0
  %235 = vmatprep.subr.mxu0 0.0
  %236 = vmatpush1.msra.mxu0 0.0
  %237 = vmatprep.subr.mxu0 0.0
  %238 = vmatpush1.msra.mxu0 0.0
  %239 = vmatprep.subr.mxu0 0.0
  %240 = vmatpush1.msra.mxu0 0.0
  %241 = vmatprep.subr.mxu0 0.0
  %242 = vmatpush1.msra.mxu0 0.0
  %243 = vmatprep.subr.mxu0 0.0
  %244 = vmatpush1.msra.mxu0 0.0
  %245 = vmatprep.subr.mxu0 0.0
  %246 = vmatpush1.msra.mxu0 0.0
  %247 = vmatprep.subr.mxu0 0.0
  %248 = vmatpush1.msra.mxu0 0.0
  %249 = vmatprep.subr.mxu0 0.0
  %250 = vmatpush1.msra.mxu0 0.0
  %251 = vmatprep.subr.mxu0 0.0
  %252 = vmatpush1.msra.mxu0 0.0
  %253 = vmatprep.subr.mxu0 0.0
  %254 = vmatpush1.msra.mxu0 0.0
  %255 = vmatprep.subr.mxu0 0.0
  %256 = vmatpush1.msra.mxu0 0.0
  %257 = vmatprep.subr.mxu0 0.0
  %258 = vmatpush1.msra.mxu0 0.0
  %259 = vmatprep.subr.mxu0 0.0
  %260 = vmatpush1.msra.mxu0 0.0
  %261 = vmatprep.subr.mxu0 0.0
  %262 = vmatpush1.msra.mxu0 0.0
  %263 = vmatprep.subr.mxu0 0.0
  %264 = vmatpush1.msra.mxu0 0.0
  %265 = vmatprep.subr.mxu0 0.0
  %266 = vmatpush1.msra.mxu0 0.0
  %267 = vmatprep.subr.mxu0 0.0
  %268 = vmatpush1.msra.mxu0 0.0
  %269 = vmatprep.subr.mxu0 0.0
  %270 = vmatpush1.msra.mxu0 0.0
  %271 = vmatprep.subr.mxu0 0.0
  %272 = vmatpush1.msra.mxu0 0.0
  %273 = vmatprep.subr.mxu0 0.0
  %274 = vmatpush1.msra.mxu0 0.0
  %275 = vmatprep.subr.mxu0 0.0
  %276 = vmatpush1.msra.mxu0 0.0
  %277 = vmatprep.mubr.f32.mxu0 0.0
  %278 = vmatmul.mubr.f32.gmra.mrb[0].mxu0 %v77
  %v279 = vpop.f32.mrb[0].mxu0
  %v280 = vadd.f32 %v71, %v279
  %v281 = vpop.f32.mrb[0].mxu0
  %282 = vmatprep.mubr.f32.mxu0 0.0
  %283 = vmatmul.mubr.f32.gmra.mrb[0].mxu0 %v80
  %v284 = vpop.f32.mrb[0].mxu0
  %v285 = vadd.f32 %v71, %v284
  %v286 = vpop.f32.mrb[0].mxu0
  %287 = vmatprep.mubr.f32.mxu0 0.0
  %288 = vmatmul.mubr.f32.gmra.mrb[0].mxu0 %v83
  %v289 = vpop.f32.mrb[0].mxu0
  %v290 = vadd.f32 %v71, %v289
  %v291 = vpop.f32.mrb[0].mxu0
  %292 = vmatprep.mubr.f32.mxu0 0.0
  %293 = vmatmul.mubr.f32.gmra.mrb[0].mxu0 %v86
  %v294 = vpop.f32.mrb[0].mxu0
  %v295 = vadd.f32 %v71, %v294
  %v296 = vpop.f32.mrb[0].mxu0
  %297 = vmatprep.mubr.f32.mxu0 0.0
  %298 = vmatmul.mubr.f32.gmra.mrb[0].mxu0 %v89
  %v299 = vpop.f32.mrb[0].mxu0
  %v300 = vadd.f32 %v71, %v299
  %v301 = vpop.f32.mrb[0].mxu0
  %302 = vmatprep.mubr.f32.mxu0 0.0
  %303 = vmatmul.mubr.f32.gmra.mrb[0].mxu0 %v92
  %v304 = vpop.f32.mrb[0].mxu0
  %v305 = vadd.f32 %v71, %v304
  %v306 = vpop.f32.mrb[0].mxu0
  %307 = vmatprep.mubr.f32.mxu0 0.0
  %308 = vmatmul.mubr.f32.gmra.mrb[0].mxu0 %v95
  %v309 = vpop.f32.mrb[0].mxu0
  %v310 = vadd.f32 %v71, %v309
  %v311 = vpop.f32.mrb[0].mxu0
  %312 = vmatprep.mubr.f32.mxu0 0.0
  %313 = vmatmul.mubr.f32.gmra.mrb[0].mxu0 %v98
  %v314 = vpop.f32.mrb[0].mxu0
  %v315 = vadd.f32 %v71, %v314
  %v316 = vpop.f32.mrb[0].mxu0
  %317 = vdwg.mxu0
  %v318 = vmax.f32 %v167, 0.0
  %v319 = vmax.f32 %v169, 0.0
  %v320 = vmax.f32 %v280, 0.0
  %v321 = vmax.f32 %v173, 0.0
  %v322 = vmax.f32 %v175, 0.0
  %v323 = vmax.f32 %v285, 0.0
  %v324 = vmax.f32 %v179, 0.0
  %v325 = vmax.f32 %v181, 0.0
  %v326 = vmax.f32 %v290, 0.0
  %v327 = vmax.f32 %v185, 0.0
  %v328 = vmax.f32 %v187, 0.0
  %v329 = vmax.f32 %v295, 0.0
  %v330 = vmax.f32 %v191, 0.0
  %v331 = vmax.f32 %v193, 0.0
  %v332 = vmax.f32 %v300, 0.0
  %v333 = vmax.f32 %v197, 0.0
  %v334 = vmax.f32 %v199, 0.0
  %v335 = vmax.f32 %v305, 0.0
  %v336 = vmax.f32 %v203, 0.0
  %v337 = vmax.f32 %v205, 0.0
  %v338 = vmax.f32 %v310, 0.0
  %v339 = vmax.f32 %v209, 0.0
  %v340 = vmax.f32 %v211, 0.0
  %v341 = vmax.f32 %v315, 0.0
  %v342 = vld [vmem:[%s3] sm:$0xff]
  %v343 = vld [vmem:[%s3 + $0x8] sm:$0xff]
  %v344 = vld [vmem:[%s3 + $0x10] sm:$0xff]
  %v345 = vld [vmem:[%s3 + $0x18] sm:$0xff]
  %v346 = vld [vmem:[%s3 + $0x20] sm:$0xff]
  %v347 = vld [vmem:[%s3 + $0x28] sm:$0xff]
  %v348 = vld [vmem:[%s3 + $0x30] sm:$0xff]
  %v349 = vld [vmem:[%s3 + $0x38] sm:$0xff]
  %v350 = vld [vmem:[%s3 + $0x40] sm:$0xff]
  %v351 = vld [vmem:[%s3 + $0x48] sm:$0xff]
  %v352 = vld [vmem:[%s3 + $0x50] sm:$0xff]
  %v353 = vld [vmem:[%s3 + $0x58] sm:$0xff]
  %v354 = vld [vmem:[%s3 + $0x60] sm:$0xff]
  %v355 = vld [vmem:[%s3 + $0x68] sm:$0xff]
  %v356 = vld [vmem:[%s3 + $0x70] sm:$0xff]
  %v357 = vld [vmem:[%s3 + $0x78] sm:$0xff]
  %v358 = vld [vmem:[%s3 + $0x80] sm:$0xff]
  %v359 = vld [vmem:[%s3 + $0x88] sm:$0xff]
  %v360 = vld [vmem:[%s3 + $0x90] sm:$0xff]
  %v361 = vld [vmem:[%s3 + $0x98] sm:$0xff]
  %v362 = vld [vmem:[%s3 + $0xa0] sm:$0xff]
  %v363 = vld [vmem:[%s3 + $0xa8] sm:$0xff]
  %v364 = vld [vmem:[%s3 + $0xb0] sm:$0xff]
  %v365 = vld [vmem:[%s3 + $0xb8] sm:$0xff]
  %v366 = vld [vmem:[%s3 + $0xc0] sm:$0xff]
  %v367 = vld [vmem:[%s3 + $0xc8] sm:$0xff]
  %v368 = vld [vmem:[%s3 + $0xd0] sm:$0xff]
  %v369 = vld [vmem:[%s3 + $0xd8] sm:$0xff]
  %v370 = vld [vmem:[%s3 + $0xe0] sm:$0xff]
  %v371 = vld [vmem:[%s3 + $0xe8] sm:$0xff]
  %v372 = vld [vmem:[%s3 + $0xf0] sm:$0xff]
  %v373 = vld [vmem:[%s3 + $0xf8] sm:$0xff]
  %v374 = vld [vmem:[%s3 + $0x100] sm:$0xff]
  %v375 = vld [vmem:[%s3 + $0x108] sm:$0xff]
  %v376 = vld [vmem:[%s3 + $0x110] sm:$0xff]
  %v377 = vld [vmem:[%s3 + $0x118] sm:$0xff]
  %v378 = vld [vmem:[%s3 + $0x120] sm:$0xff]
  %v379 = vld [vmem:[%s3 + $0x128] sm:$0xff]
  %v380 = vld [vmem:[%s3 + $0x130] sm:$0xff]
  %v381 = vld [vmem:[%s3 + $0x138] sm:$0xff]
  %v382 = vld [vmem:[%s3 + $0x140] sm:$0xff]
  %v383 = vld [vmem:[%s3 + $0x148] sm:$0xff]
  %v384 = vld [vmem:[%s3 + $0x150] sm:$0xff]
  %v385 = vld [vmem:[%s3 + $0x158] sm:$0xff]
  %v386 = vld [vmem:[%s3 + $0x160] sm:$0xff]
  %v387 = vld [vmem:[%s3 + $0x168] sm:$0xff]
  %v388 = vld [vmem:[%s3 + $0x170] sm:$0xff]
  %v389 = vld [vmem:[%s3 + $0x178] sm:$0xff]
  %v390 = vld [vmem:[%s3 + $0x180] sm:$0xff]
  %v391 = vld [vmem:[%s3 + $0x188] sm:$0xff]
  %v392 = vld [vmem:[%s3 + $0x190] sm:$0xff]
  %v393 = vld [vmem:[%s3 + $0x198] sm:$0xff]
  %v394 = vld [vmem:[%s3 + $0x1a0] sm:$0xff]
  %v395 = vld [vmem:[%s3 + $0x1a8] sm:$0xff]
  %v396 = vld [vmem:[%s3 + $0x1b0] sm:$0xff]
  %v397 = vld [vmem:[%s3 + $0x1b8] sm:$0xff]
  %v398 = vld [vmem:[%s3 + $0x1c0] sm:$0xff]
  %v399 = vld [vmem:[%s3 + $0x1c8] sm:$0xff]
  %v400 = vld [vmem:[%s3 + $0x1d0] sm:$0xff]
  %v401 = vld [vmem:[%s3 + $0x1d8] sm:$0xff]
  %v402 = vld [vmem:[%s3 + $0x1e0] sm:$0xff]
  %v403 = vld [vmem:[%s3 + $0x1e8] sm:$0xff]
  %v404 = vld [vmem:[%s3 + $0x1f0] sm:$0xff]
  %v405 = vld [vmem:[%s3 + $0x1f8] sm:$0xff]
  %v406 = vld [vmem:[%s3 + $0x200] sm:$0xff]
  %v407 = vld [vmem:[%s3 + $0x208] sm:$0xff]
  %v408 = vld [vmem:[%s3 + $0x210] sm:$0xff]
  %v409 = vld [vmem:[%s3 + $0x218] sm:$0xff]
  %v410 = vld [vmem:[%s3 + $0x220] sm:$0xff]
  %v411 = vld [vmem:[%s3 + $0x228] sm:$0xff]
  %v412 = vld [vmem:[%s3 + $0x230] sm:$0xff]
  %v413 = vld [vmem:[%s3 + $0x238] sm:$0xff]
  %v414 = vld [vmem:[%s3 + $0x240] sm:$0xff]
  %v415 = vld [vmem:[%s3 + $0x248] sm:$0xff]
  %v416 = vld [vmem:[%s3 + $0x250] sm:$0xff]
  %v417 = vld [vmem:[%s3 + $0x258] sm:$0xff]
  %v418 = vld [vmem:[%s3 + $0x260] sm:$0xff]
  %v419 = vld [vmem:[%s3 + $0x268] sm:$0xff]
  %v420 = vld [vmem:[%s3 + $0x270] sm:$0xff]
  %v421 = vld [vmem:[%s3 + $0x278] sm:$0xff]
  %v422 = vld [vmem:[%s4] sm:$0x3]
  %v424 = vlaneseq
  %v425 = vshrl.u32 %v424, 7
  %v426 = vsub.s32 0, %v425
  %v427 = vrot.slane %v422, %v426
  %v428 = vlaneseq
  %v429 = vshrl.u32 %v428, 7
  %v430 = vsub.s32 1, %v429
  %v431 = vrot.slane %v422, %v430
  %vm434 = vcmask 523264
  %v436 = vsel %vm434, %v320, 0
  %v439 = vsel %vm434, %v323, 0
  %v442 = vsel %vm434, %v326, 0
  %v445 = vsel %vm434, %v329, 0
  %v448 = vsel %vm434, %v332, 0
  %v451 = vsel %vm434, %v335, 0
  %v454 = vsel %vm434, %v338, 0
  %v457 = vsel %vm434, %v341, 0
  %459 = vmatprep.subr.mxu0 %v343
  %460 = vmatpush1.msra.mxu0 %v342
  %461 = vmatprep.subr.mxu0 %v345
  %462 = vmatpush1.msra.mxu0 %v344
  %463 = vmatprep.subr.mxu0 %v347
  %464 = vmatpush1.msra.mxu0 %v346
  %465 = vmatprep.subr.mxu0 %v349
  %466 = vmatpush1.msra.mxu0 %v348
  %467 = vmatprep.subr.mxu0 %v351
  %468 = vmatpush1.msra.mxu0 %v350
  %469 = vmatprep.subr.mxu0 %v353
  %470 = vmatpush1.msra.mxu0 %v352
  %471 = vmatprep.subr.mxu0 %v355
  %472 = vmatpush1.msra.mxu0 %v354
  %473 = vmatprep.subr.mxu0 %v357
  %474 = vmatpush1.msra.mxu0 %v356
  %475 = vmatprep.subr.mxu0 %v359
  %476 = vmatpush1.msra.mxu0 %v358
  %477 = vmatprep.subr.mxu0 %v361
  %478 = vmatpush1.msra.mxu0 %v360
  %479 = vmatprep.subr.mxu0 %v363
  %480 = vmatpush1.msra.mxu0 %v362
  %481 = vmatprep.subr.mxu0 %v365
  %482 = vmatpush1.msra.mxu0 %v364
  %483 = vmatprep.subr.mxu0 %v367
  %484 = vmatpush1.msra.mxu0 %v366
  %485 = vmatprep.subr.mxu0 %v369
  %486 = vmatpush1.msra.mxu0 %v368
  %487 = vmatprep.subr.mxu0 %v371
  %488 = vmatpush1.msra.mxu0 %v370
  %489 = vmatprep.subr.mxu0 %v373
  %490 = vmatpush1.msra.mxu0 %v372
  %491 = vmatprep.subr.mxu0 %v375
  %492 = vmatpush1.msra.mxu0 %v374
  %493 = vmatprep.subr.mxu0 %v377
  %494 = vmatpush1.msra.mxu0 %v376
  %495 = vmatprep.subr.mxu0 %v379
  %496 = vmatpush1.msra.mxu0 %v378
  %497 = vmatprep.subr.mxu0 %v381
  %498 = vmatpush1.msra.mxu0 %v380
  %499 = vmatprep.subr.mxu0 %v383
  %500 = vmatpush1.msra.mxu0 %v382
  %501 = vmatprep.subr.mxu0 %v385
  %502 = vmatpush1.msra.mxu0 %v384
  %503 = vmatprep.subr.mxu0 %v387
  %504 = vmatpush1.msra.mxu0 %v386
  %505 = vmatprep.subr.mxu0 %v389
  %506 = vmatpush1.msra.mxu0 %v388
  %507 = vmatprep.subr.mxu0 %v391
  %508 = vmatpush1.msra.mxu0 %v390
  %509 = vmatprep.subr.mxu0 %v393
  %510 = vmatpush1.msra.mxu0 %v392
  %511 = vmatprep.subr.mxu0 %v395
  %512 = vmatpush1.msra.mxu0 %v394
  %513 = vmatprep.subr.mxu0 %v397
  %514 = vmatpush1.msra.mxu0 %v396
  %515 = vmatprep.subr.mxu0 %v399
  %516 = vmatpush1.msra.mxu0 %v398
  %517 = vmatprep.subr.mxu0 %v401
  %518 = vmatpush1.msra.mxu0 %v400
  %519 = vmatprep.subr.mxu0 %v403
  %520 = vmatpush1.msra.mxu0 %v402
  %521 = vmatprep.subr.mxu0 %v405
  %522 = vmatpush1.msra.mxu0 %v404
  %523 = vmatprep.mubr.f32.mxu0 %v319
  %524 = vmatmul.mubr.f32.gmra.mrb[0].mxu0 %v318
  %v525 = vpop.f32.mrb[0].mxu0
  %v526 = vadd.f32 %v427, %v525
  %v527 = vpop.f32.mrb[0].mxu0
  %v528 = vadd.f32 %v431, %v527
  %529 = vmatprep.mubr.f32.mxu0 %v322
  %530 = vmatmul.mubr.f32.gmra.mrb[0].mxu0 %v321
  %v531 = vpop.f32.mrb[0].mxu0
  %v532 = vadd.f32 %v427, %v531
  %v533 = vpop.f32.mrb[0].mxu0
  %v534 = vadd.f32 %v431, %v533
  %535 = vmatprep.mubr.f32.mxu0 %v325
  %536 = vmatmul.mubr.f32.gmra.mrb[0].mxu0 %v324
  %v537 = vpop.f32.mrb[0].mxu0
  %v538 = vadd.f32 %v427, %v537
  %v539 = vpop.f32.mrb[0].mxu0
  %v540 = vadd.f32 %v431, %v539
  %541 = vmatprep.mubr.f32.mxu0 %v328
  %542 = vmatmul.mubr.f32.gmra.mrb[0].mxu0 %v327
  %v543 = vpop.f32.mrb[0].mxu0
  %v544 = vadd.f32 %v427, %v543
  %v545 = vpop.f32.mrb[0].mxu0
  %v546 = vadd.f32 %v431, %v545
  %547 = vmatprep.mubr.f32.mxu0 %v331
  %548 = vmatmul.mubr.f32.gmra.mrb[0].mxu0 %v330
  %v549 = vpop.f32.mrb[0].mxu0
  %v550 = vadd.f32 %v427, %v549
  %v551 = vpop.f32.mrb[0].mxu0
  %v552 = vadd.f32 %v431, %v551
  %553 = vmatprep.mubr.f32.mxu0 %v334
  %554 = vmatmul.mubr.f32.gmra.mrb[0].mxu0 %v333
  %v555 = vpop.f32.mrb[0].mxu0
  %v556 = vadd.f32 %v427, %v555
  %v557 = vpop.f32.mrb[0].mxu0
  %v558 = vadd.f32 %v431, %v557
  %559 = vmatprep.mubr.f32.mxu0 %v337
  %560 = vmatmul.mubr.f32.gmra.mrb[0].mxu0 %v336
  %v561 = vpop.f32.mrb[0].mxu0
  %v562 = vadd.f32 %v427, %v561
  %v563 = vpop.f32.mrb[0].mxu0
  %v564 = vadd.f32 %v431, %v563
  %565 = vmatprep.mubr.f32.mxu0 %v340
  %566 = vmatmul.mubr.f32.gmra.mrb[0].mxu0 %v339
  %v567 = vpop.f32.mrb[0].mxu0
  %v568 = vadd.f32 %v427, %v567
  %v569 = vpop.f32.mrb[0].mxu0
  %v570 = vadd.f32 %v431, %v569
  %571 = vdwg.mxu0
  %572 = vmatprep.subr.mxu0 %v407
  %573 = vmatpush1.msra.mxu0 %v406
  %574 = vmatprep.subr.mxu0 %v409
  %575 = vmatpush1.msra.mxu0 %v408
  %576 = vmatprep.subr.mxu0 %v411
  %577 = vmatpush1.msra.mxu0 %v410
  %578 = vmatprep.subr.mxu0 %v413
  %579 = vmatpush1.msra.mxu0 %v412
  %580 = vmatprep.subr.mxu0 %v415
  %581 = vmatpush1.msra.mxu0 %v414
  %582 = vmatprep.subr.mxu0 %v417
  %583 = vmatpush1.msra.mxu0 %v416
  %584 = vmatprep.subr.mxu0 %v419
  %585 = vmatpush1.msra.mxu0 %v418
  %586 = vmatprep.subr.mxu0 %v421
  %587 = vmatpush1.msra.mxu0 %v420
  %588 = vmatprep.subr.mxu0 0.0
  %589 = vmatpush1.msra.mxu0 0.0
  %590 = vmatprep.subr.mxu0 0.0
  %591 = vmatpush1.msra.mxu0 0.0
  %592 = vmatprep.subr.mxu0 0.0
  %593 = vmatpush1.msra.mxu0 0.0
  %594 = vmatprep.subr.mxu0 0.0
  %595 = vmatpush1.msra.mxu0 0.0
  %596 = vmatprep.subr.mxu0 0.0
  %597 = vmatpush1.msra.mxu0 0.0
  %598 = vmatprep.subr.mxu0 0.0
  %599 = vmatpush1.msra.mxu0 0.0
  %600 = vmatprep.subr.mxu0 0.0
  %601 = vmatpush1.msra.mxu0 0.0
  %602 = vmatprep.subr.mxu0 0.0
  %603 = vmatpush1.msra.mxu0 0.0
  %604 = vmatprep.subr.mxu0 0.0
  %605 = vmatpush1.msra.mxu0 0.0
  %606 = vmatprep.subr.mxu0 0.0
  %607 = vmatpush1.msra.mxu0 0.0
  %608 = vmatprep.subr.mxu0 0.0
  %609 = vmatpush1.msra.mxu0 0.0
  %610 = vmatprep.subr.mxu0 0.0
  %611 = vmatpush1.msra.mxu0 0.0
  %612 = vmatprep.subr.mxu0 0.0
  %613 = vmatpush1.msra.mxu0 0.0
  %614 = vmatprep.subr.mxu0 0.0
  %615 = vmatpush1.msra.mxu0 0.0
  %616 = vmatprep.subr.mxu0 0.0
  %617 = vmatpush1.msra.mxu0 0.0
  %618 = vmatprep.subr.mxu0 0.0
  %619 = vmatpush1.msra.mxu0 0.0
  %620 = vmatprep.subr.mxu0 0.0
  %621 = vmatpush1.msra.mxu0 0.0
  %622 = vmatprep.subr.mxu0 0.0
  %623 = vmatpush1.msra.mxu0 0.0
  %624 = vmatprep.subr.mxu0 0.0
  %625 = vmatpush1.msra.mxu0 0.0
  %626 = vmatprep.subr.mxu0 0.0
  %627 = vmatpush1.msra.mxu0 0.0
  %628 = vmatprep.subr.mxu0 0.0
  %629 = vmatpush1.msra.mxu0 0.0
  %630 = vmatprep.subr.mxu0 0.0
  %631 = vmatpush1.msra.mxu0 0.0
  %632 = vmatprep.subr.mxu0 0.0
  %633 = vmatpush1.msra.mxu0 0.0
  %634 = vmatprep.subr.mxu0 0.0
  %635 = vmatpush1.msra.mxu0 0.0
  %636 = vmatprep.mubr.f32.mxu0 0.0
  %637 = vmatmul.mubr.f32.gmra.mrb[0].mxu0 %v436
  %v638 = vpop.f32.mrb[0].mxu0
  %v639 = vadd.f32 %v526, %v638
  %v640 = vpop.f32.mrb[0].mxu0
  %v641 = vadd.f32 %v528, %v640
  %642 = vmatprep.mubr.f32.mxu0 0.0
  %643 = vmatmul.mubr.f32.gmra.mrb[0].mxu0 %v439
  %v644 = vpop.f32.mrb[0].mxu0
  %v645 = vadd.f32 %v532, %v644
  %v646 = vpop.f32.mrb[0].mxu0
  %v647 = vadd.f32 %v534, %v646
  %648 = vmatprep.mubr.f32.mxu0 0.0
  %649 = vmatmul.mubr.f32.gmra.mrb[0].mxu0 %v442
  %v650 = vpop.f32.mrb[0].mxu0
  %v651 = vadd.f32 %v538, %v650
  %v652 = vpop.f32.mrb[0].mxu0
  %v653 = vadd.f32 %v540, %v652
  %654 = vmatprep.mubr.f32.mxu0 0.0
  %655 = vmatmul.mubr.f32.gmra.mrb[0].mxu0 %v445
  %v656 = vpop.f32.mrb[0].mxu0
  %v657 = vadd.f32 %v544, %v656
  %v658 = vpop.f32.mrb[0].mxu0
  %v659 = vadd.f32 %v546, %v658
  %660 = vmatprep.mubr.f32.mxu0 0.0
  %661 = vmatmul.mubr.f32.gmra.mrb[0].mxu0 %v448
  %v662 = vpop.f32.mrb[0].mxu0
  %v663 = vadd.f32 %v550, %v662
  %v664 = vpop.f32.mrb[0].mxu0
  %v665 = vadd.f32 %v552, %v664
  %666 = vmatprep.mubr.f32.mxu0 0.0
  %667 = vmatmul.mubr.f32.gmra.mrb[0].mxu0 %v451
  %v668 = vpop.f32.mrb[0].mxu0
  %v669 = vadd.f32 %v556, %v668
  %v670 = vpop.f32.mrb[0].mxu0
  %v671 = vadd.f32 %v558, %v670
  %672 = vmatprep.mubr.f32.mxu0 0.0
  %673 = vmatmul.mubr.f32.gmra.mrb[0].mxu0 %v454
  %v674 = vpop.f32.mrb[0].mxu0
  %v675 = vadd.f32 %v562, %v674
  %v676 = vpop.f32.mrb[0].mxu0
  %v677 = vadd.f32 %v564, %v676
  %678 = vmatprep.mubr.f32.mxu0 0.0
  %679 = vmatmul.mubr.f32.gmra.mrb[0].mxu0 %v457
  %v680 = vpop.f32.mrb[0].mxu0
  %v681 = vadd.f32 %v568, %v680
  %v682 = vpop.f32.mrb[0].mxu0
  %v683 = vadd.f32 %v570, %v682
  %684 = vdwg.mxu0
  %v685 = vld [vmem:[%s5] sm:$0xff]
  %v686 = vld [vmem:[%s5 + $0x8] sm:$0xff]
  %v687 = vld [vmem:[%s5 + $0x10] sm:$0xff]
  %v688 = vld [vmem:[%s5 + $0x18] sm:$0xff]
  %v689 = vld [vmem:[%s5 + $0x20] sm:$0xff]
  %v690 = vld [vmem:[%s5 + $0x28] sm:$0xff]
  %v691 = vld [vmem:[%s5 + $0x30] sm:$0xff]
  %v692 = vld [vmem:[%s5 + $0x38] sm:$0xff]
  %v693 = vld [vmem:[%s5 + $0x40] sm:$0xff]
  %v694 = vld [vmem:[%s5 + $0x48] sm:$0xff]
  %v695 = vld [vmem:[%s5 + $0x50] sm:$0xff]
  %v696 = vld [vmem:[%s5 + $0x58] sm:$0xff]
  %v697 = vld [vmem:[%s5 + $0x60] sm:$0xff]
  %v698 = vld [vmem:[%s5 + $0x68] sm:$0xff]
  %v699 = vld [vmem:[%s5 + $0x70] sm:$0xff]
  %v700 = vld [vmem:[%s5 + $0x78] sm:$0xff]
  %v701 = vld [vmem:[%s5 + $0x80] sm:$0xff]
  %v702 = vld [vmem:[%s5 + $0x88] sm:$0xff]
  %v703 = vld [vmem:[%s5 + $0x90] sm:$0xff]
  %v704 = vld [vmem:[%s5 + $0x98] sm:$0xff]
  %v705 = vld [vmem:[%s6] sm:$0x1]
  %v707 = vlaneseq
  %v708 = vshrl.u32 %v707, 7
  %v709 = vsub.s32 0, %v708
  %v710 = vrot.slane %v705, %v709
  %v713 = vsel %vm75, %v641, 0
  %v716 = vsel %vm75, %v647, 0
  %v719 = vsel %vm75, %v653, 0
  %v722 = vsel %vm75, %v659, 0
  %v725 = vsel %vm75, %v665, 0
  %v728 = vsel %vm75, %v671, 0
  %v731 = vsel %vm75, %v677, 0
  %v734 = vsel %vm75, %v683, 0
  %736 = vmatprep.subr.mxu0 0.0
  %737 = vmatpush1.msra.mxu0 %v685
  %738 = vmatprep.subr.mxu0 0.0
  %739 = vmatpush1.msra.mxu0 %v686
  %740 = vmatprep.subr.mxu0 0.0
  %741 = vmatpush1.msra.mxu0 %v687
  %742 = vmatprep.subr.mxu0 0.0
  %743 = vmatpush1.msra.mxu0 %v688
  %744 = vmatprep.subr.mxu0 0.0
  %745 = vmatpush1.msra.mxu0 %v689
  %746 = vmatprep.subr.mxu0 0.0
  %747 = vmatpush1.msra.mxu0 %v690
  %748 = vmatprep.subr.mxu0 0.0
  %749 = vmatpush1.msra.mxu0 %v691
  %750 = vmatprep.subr.mxu0 0.0
  %751 = vmatpush1.msra.mxu0 %v692
  %752 = vmatprep.subr.mxu0 0.0
  %753 = vmatpush1.msra.mxu0 %v693
  %754 = vmatprep.subr.mxu0 0.0
  %755 = vmatpush1.msra.mxu0 %v694
  %756 = vmatprep.subr.mxu0 0.0
  %757 = vmatpush1.msra.mxu0 %v695
  %758 = vmatprep.subr.mxu0 0.0
  %759 = vmatpush1.msra.mxu0 %v696
  %760 = vmatprep.subr.mxu0 0.0
  %761 = vmatpush1.msra.mxu0 %v697
  %762 = vmatprep.subr.mxu0 0.0
  %763 = vmatpush1.msra.mxu0 %v698
  %764 = vmatprep.subr.mxu0 0.0
  %765 = vmatpush1.msra.mxu0 %v699
  %766 = vmatprep.subr.mxu0 0.0
  %767 = vmatpush1.msra.mxu0 %v700
  %768 = vmatprep.subr.mxu0 0.0
  %769 = vmatpush1.msra.mxu0 %v701
  %770 = vmatprep.subr.mxu0 0.0
  %771 = vmatpush1.msra.mxu0 %v702
  %772 = vmatprep.subr.mxu0 0.0
  %773 = vmatpush1.msra.mxu0 %v703
  %774 = vmatprep.subr.mxu0 0.0
  %775 = vmatpush1.msra.mxu0 %v704
  %776 = vmatprep.subr.mxu0 0.0
  %777 = vmatpush1.msra.mxu0 0.0
  %778 = vmatprep.subr.mxu0 0.0
  %779 = vmatpush1.msra.mxu0 0.0
  %780 = vmatprep.subr.mxu0 0.0
  %781 = vmatpush1.msra.mxu0 0.0
  %782 = vmatprep.subr.mxu0 0.0
  %783 = vmatpush1.msra.mxu0 0.0
  %784 = vmatprep.subr.mxu0 0.0
  %785 = vmatpush1.msra.mxu0 0.0
  %786 = vmatprep.subr.mxu0 0.0
  %787 = vmatpush1.msra.mxu0 0.0
  %788 = vmatprep.subr.mxu0 0.0
  %789 = vmatpush1.msra.mxu0 0.0
  %790 = vmatprep.subr.mxu0 0.0
  %791 = vmatpush1.msra.mxu0 0.0
  %792 = vmatprep.subr.mxu0 0.0
  %793 = vmatpush1.msra.mxu0 0.0
  %794 = vmatprep.subr.mxu0 0.0
  %795 = vmatpush1.msra.mxu0 0.0
  %796 = vmatprep.subr.mxu0 0.0
  %797 = vmatpush1.msra.mxu0 0.0
  %798 = vmatprep.subr.mxu0 0.0
  %799 = vmatpush1.msra.mxu0 0.0
  %800 = vmatprep.mubr.f32.mxu0 %v713
  %801 = vmatmul.mubr.f32.gmra.mrb[0].mxu0 %v639
  %v802 = vpop.f32.mrb[0].mxu0
  %v803 = vadd.f32 %v710, %v802
  %v804 = vpop.f32.mrb[0].mxu0
  %805 = vmatprep.mubr.f32.mxu0 %v716
  %806 = vmatmul.mubr.f32.gmra.mrb[0].mxu0 %v645
  %v807 = vpop.f32.mrb[0].mxu0
  %v808 = vadd.f32 %v710, %v807
  %v809 = vpop.f32.mrb[0].mxu0
  %810 = vmatprep.mubr.f32.mxu0 %v719
  %811 = vmatmul.mubr.f32.gmra.mrb[0].mxu0 %v651
  %v812 = vpop.f32.mrb[0].mxu0
  %v813 = vadd.f32 %v710, %v812
  %v814 = vpop.f32.mrb[0].mxu0
  %815 = vmatprep.mubr.f32.mxu0 %v722
  %816 = vmatmul.mubr.f32.gmra.mrb[0].mxu0 %v657
  %v817 = vpop.f32.mrb[0].mxu0
  %v818 = vadd.f32 %v710, %v817
  %v819 = vpop.f32.mrb[0].mxu0
  %820 = vmatprep.mubr.f32.mxu0 %v725
  %821 = vmatmul.mubr.f32.gmra.mrb[0].mxu0 %v663
  %v822 = vpop.f32.mrb[0].mxu0
  %v823 = vadd.f32 %v710, %v822
  %v824 = vpop.f32.mrb[0].mxu0
  %825 = vmatprep.mubr.f32.mxu0 %v728
  %826 = vmatmul.mubr.f32.gmra.mrb[0].mxu0 %v669
  %v827 = vpop.f32.mrb[0].mxu0
  %v828 = vadd.f32 %v710, %v827
  %v829 = vpop.f32.mrb[0].mxu0
  %830 = vmatprep.mubr.f32.mxu0 %v731
  %831 = vmatmul.mubr.f32.gmra.mrb[0].mxu0 %v675
  %v832 = vpop.f32.mrb[0].mxu0
  %v833 = vadd.f32 %v710, %v832
  %v834 = vpop.f32.mrb[0].mxu0
  %835 = vmatprep.mubr.f32.mxu0 %v734
  %836 = vmatmul.mubr.f32.gmra.mrb[0].mxu0 %v681
  %v837 = vpop.f32.mrb[0].mxu0
  %v838 = vadd.f32 %v710, %v837
  %v839 = vpop.f32.mrb[0].mxu0
  %840 = vdwg.mxu0
  %v841 = vmax.f32 %v803, 0.0
  %v842 = vmax.f32 %v808, 0.0
  %v843 = vmax.f32 %v813, 0.0
  %v844 = vmax.f32 %v818, 0.0
  %v845 = vmax.f32 %v823, 0.0
  %v846 = vmax.f32 %v828, 0.0
  %v847 = vmax.f32 %v833, 0.0
  %v848 = vmax.f32 %v838, 0.0
  %v849 = vld [vmem:[%s7] sm:$0xff]
  %v850 = vld [vmem:[%s7 + $0x8] sm:$0xff]
  %v851 = vld [vmem:[%s7 + $0x10] sm:$0xff]
  %v852 = vld [vmem:[%s7 + $0x18] sm:$0xff]
  %v853 = vld [vmem:[%s7 + $0x20] sm:$0xff]
  %v854 = vld [vmem:[%s7 + $0x28] sm:$0xff]
  %v855 = vld [vmem:[%s7 + $0x30] sm:$0xff]
  %v856 = vld [vmem:[%s7 + $0x38] sm:$0xff]
  %v857 = vld [vmem:[%s7 + $0x40] sm:$0xff]
  %v858 = vld [vmem:[%s7 + $0x48] sm:$0xff]
  %v859 = vld [vmem:[%s7 + $0x50] sm:$0xff]
  %v860 = vld [vmem:[%s7 + $0x58] sm:$0xff]
  %v861 = vld [vmem:[%s7 + $0x60] sm:$0xff]
  %v862 = vld [vmem:[%s7 + $0x68] sm:$0xff]
  %v863 = vld [vmem:[%s7 + $0x70] sm:$0xff]
  %v864 = vld [vmem:[%s7 + $0x78] sm:$0xff]
  %v865 = vld [vmem:[%s8] sm:$0x1]
  %v867 = vlaneseq
  %v868 = vshrl.u32 %v867, 7
  %v869 = vsub.s32 0, %v868
  %v870 = vrot.slane %v865, %v869
  %872 = vmatprep.subr.mxu0 0.0
  %873 = vmatpush1.msra.mxu0 %v849
  %874 = vmatprep.subr.mxu0 0.0
  %875 = vmatpush1.msra.mxu0 %v850
  %876 = vmatprep.subr.mxu0 0.0
  %877 = vmatpush1.msra.mxu0 %v851
  %878 = vmatprep.subr.mxu0 0.0
  %879 = vmatpush1.msra.mxu0 %v852
  %880 = vmatprep.subr.mxu0 0.0
  %881 = vmatpush1.msra.mxu0 %v853
  %882 = vmatprep.subr.mxu0 0.0
  %883 = vmatpush1.msra.mxu0 %v854
  %884 = vmatprep.subr.mxu0 0.0
  %885 = vmatpush1.msra.mxu0 %v855
  %886 = vmatprep.subr.mxu0 0.0
  %887 = vmatpush1.msra.mxu0 %v856
  %888 = vmatprep.subr.mxu0 0.0
  %889 = vmatpush1.msra.mxu0 %v857
  %890 = vmatprep.subr.mxu0 0.0
  %891 = vmatpush1.msra.mxu0 %v858
  %892 = vmatprep.subr.mxu0 0.0
  %893 = vmatpush1.msra.mxu0 %v859
  %894 = vmatprep.subr.mxu0 0.0
  %895 = vmatpush1.msra.mxu0 %v860
  %896 = vmatprep.subr.mxu0 0.0
  %897 = vmatpush1.msra.mxu0 %v861
  %898 = vmatprep.subr.mxu0 0.0
  %899 = vmatpush1.msra.mxu0 %v862
  %900 = vmatprep.subr.mxu0 0.0
  %901 = vmatpush1.msra.mxu0 %v863
  %902 = vmatprep.subr.mxu0 0.0
  %903 = vmatpush1.msra.mxu0 %v864
  %904 = vmatprep.subr.mxu0 0.0
  %905 = vmatpush1.msra.mxu0 0.0
  %906 = vmatprep.subr.mxu0 0.0
  %907 = vmatpush1.msra.mxu0 0.0
  %908 = vmatprep.subr.mxu0 0.0
  %909 = vmatpush1.msra.mxu0 0.0
  %910 = vmatprep.subr.mxu0 0.0
  %911 = vmatpush1.msra.mxu0 0.0
  %912 = vmatprep.subr.mxu0 0.0
  %913 = vmatpush1.msra.mxu0 0.0
  %914 = vmatprep.subr.mxu0 0.0
  %915 = vmatpush1.msra.mxu0 0.0
  %916 = vmatprep.subr.mxu0 0.0
  %917 = vmatpush1.msra.mxu0 0.0
  %918 = vmatprep.subr.mxu0 0.0
  %919 = vmatpush1.msra.mxu0 0.0
  %920 = vmatprep.subr.mxu0 0.0
  %921 = vmatpush1.msra.mxu0 0.0
  %922 = vmatprep.subr.mxu0 0.0
  %923 = vmatpush1.msra.mxu0 0.0
  %924 = vmatprep.subr.mxu0 0.0
  %925 = vmatpush1.msra.mxu0 0.0
  %926 = vmatprep.subr.mxu0 0.0
  %927 = vmatpush1.msra.mxu0 0.0
  %928 = vmatprep.subr.mxu0 0.0
  %929 = vmatpush1.msra.mxu0 0.0
  %930 = vmatprep.subr.mxu0 0.0
  %931 = vmatpush1.msra.mxu0 0.0
  %932 = vmatprep.subr.mxu0 0.0
  %933 = vmatpush1.msra.mxu0 0.0
  %934 = vmatprep.subr.mxu0 0.0
  %935 = vmatpush1.msra.mxu0 0.0
  %936 = vmatprep.mubr.f32.mxu0 0.0
  %937 = vmatmul.mubr.f32.gmra.mrb[0].mxu0 %v841
  %v938 = vpop.f32.mrb[0].mxu0
  %v939 = vadd.f32 %v870, %v938
  %v940 = vpop.f32.mrb[0].mxu0
  %941 = vmatprep.mubr.f32.mxu0 0.0
  %942 = vmatmul.mubr.f32.gmra.mrb[0].mxu0 %v842
  %v943 = vpop.f32.mrb[0].mxu0
  %v944 = vadd.f32 %v870, %v943
  %v945 = vpop.f32.mrb[0].mxu0
  %946 = vmatprep.mubr.f32.mxu0 0.0
  %947 = vmatmul.mubr.f32.gmra.mrb[0].mxu0 %v843
  %v948 = vpop.f32.mrb[0].mxu0
  %v949 = vadd.f32 %v870, %v948
  %v950 = vpop.f32.mrb[0].mxu0
  %951 = vmatprep.mubr.f32.mxu0 0.0
  %952 = vmatmul.mubr.f32.gmra.mrb[0].mxu0 %v844
  %v953 = vpop.f32.mrb[0].mxu0
  %v954 = vadd.f32 %v870, %v953
  %v955 = vpop.f32.mrb[0].mxu0
  %956 = vmatprep.mubr.f32.mxu0 0.0
  %957 = vmatmul.mubr.f32.gmra.mrb[0].mxu0 %v845
  %v958 = vpop.f32.mrb[0].mxu0
  %v959 = vadd.f32 %v870, %v958
  %v960 = vpop.f32.mrb[0].mxu0
  %961 = vmatprep.mubr.f32.mxu0 0.0
  %962 = vmatmul.mubr.f32.gmra.mrb[0].mxu0 %v846
  %v963 = vpop.f32.mrb[0].mxu0
  %v964 = vadd.f32 %v870, %v963
  %v965 = vpop.f32.mrb[0].mxu0
  %966 = vmatprep.mubr.f32.mxu0 0.0
  %967 = vmatmul.mubr.f32.gmra.mrb[0].mxu0 %v847
  %v968 = vpop.f32.mrb[0].mxu0
  %v969 = vadd.f32 %v870, %v968
  %v970 = vpop.f32.mrb[0].mxu0
  %971 = vmatprep.mubr.f32.mxu0 0.0
  %972 = vmatmul.mubr.f32.gmra.mrb[0].mxu0 %v848
  %v973 = vpop.f32.mrb[0].mxu0
  %v974 = vadd.f32 %v870, %v973
  %v975 = vpop.f32.mrb[0].mxu0
  %976 = vdwg.mxu0
  %v977 = vmax.f32 %v939, 0.0
  %v978 = vmax.f32 %v944, 0.0
  %v979 = vmax.f32 %v949, 0.0
  %v980 = vmax.f32 %v954, 0.0
  %v981 = vmax.f32 %v959, 0.0
  %v982 = vmax.f32 %v964, 0.0
  %v983 = vmax.f32 %v969, 0.0
  %v984 = vmax.f32 %v974, 0.0
  %v985 = vld [vmem:[%s9] sm:$0xff]
  %v986 = vld [vmem:[%s9 + $0x8] sm:$0xff]
  %v987 = vld [vmem:[%s9 + $0x10] sm:$0xff]
  %v988 = vld [vmem:[%s9 + $0x18] sm:$0xff]
  %v989 = vld [vmem:[%s9 + $0x20] sm:$0xff]
  %v990 = vld [vmem:[%s9 + $0x28] sm:$0xff]
  %v991 = vld [vmem:[%s9 + $0x30] sm:$0xff]
  %v992 = vld [vmem:[%s9 + $0x38] sm:$0xff]
  %v993 = vld [vmem:[%s10] sm:$0x1]
  %v995 = vlaneseq
  %v996 = vshrl.u32 %v995, 7
  %v997 = vsub.s32 0, %v996
  %v998 = vrot.slane %v993, %v997
  %v1001 = vsel %vm434, %v977, 0
  %v1004 = vsel %vm434, %v978, 0
  %v1007 = vsel %vm434, %v979, 0
  %v1010 = vsel %vm434, %v980, 0
  %v1013 = vsel %vm434, %v981, 0
  %v1016 = vsel %vm434, %v982, 0
  %v1019 = vsel %vm434, %v983, 0
  %v1022 = vsel %vm434, %v984, 0
  %1024 = vmatprep.subr.mxu0 0.0
  %1025 = vmatpush1.msra.mxu0 %v985
  %1026 = vmatprep.subr.mxu0 0.0
  %1027 = vmatpush1.msra.mxu0 %v986
  %1028 = vmatprep.subr.mxu0 0.0
  %1029 = vmatpush1.msra.mxu0 %v987
  %1030 = vmatprep.subr.mxu0 0.0
  %1031 = vmatpush1.msra.mxu0 %v988
  %1032 = vmatprep.subr.mxu0 0.0
  %1033 = vmatpush1.msra.mxu0 %v989
  %1034 = vmatprep.subr.mxu0 0.0
  %1035 = vmatpush1.msra.mxu0 %v990
  %1036 = vmatprep.subr.mxu0 0.0
  %1037 = vmatpush1.msra.mxu0 %v991
  %1038 = vmatprep.subr.mxu0 0.0
  %1039 = vmatpush1.msra.mxu0 %v992
  %1040 = vmatprep.subr.mxu0 0.0
  %1041 = vmatpush1.msra.mxu0 0.0
  %1042 = vmatprep.subr.mxu0 0.0
  %1043 = vmatpush1.msra.mxu0 0.0
  %1044 = vmatprep.subr.mxu0 0.0
  %1045 = vmatpush1.msra.mxu0 0.0
  %1046 = vmatprep.subr.mxu0 0.0
  %1047 = vmatpush1.msra.mxu0 0.0
  %1048 = vmatprep.subr.mxu0 0.0
  %1049 = vmatpush1.msra.mxu0 0.0
  %1050 = vmatprep.subr.mxu0 0.0
  %1051 = vmatpush1.msra.mxu0 0.0
  %1052 = vmatprep.subr.mxu0 0.0
  %1053 = vmatpush1.msra.mxu0 0.0
  %1054 = vmatprep.subr.mxu0 0.0
  %1055 = vmatpush1.msra.mxu0 0.0
  %1056 = vmatprep.subr.mxu0 0.0
  %1057 = vmatpush1.msra.mxu0 0.0
  %1058 = vmatprep.subr.mxu0 0.0
  %1059 = vmatpush1.msra.mxu0 0.0
  %1060 = vmatprep.subr.mxu0 0.0
  %1061 = vmatpush1.msra.mxu0 0.0
  %1062 = vmatprep.subr.mxu0 0.0
  %1063 = vmatpush1.msra.mxu0 0.0
  %1064 = vmatprep.subr.mxu0 0.0
  %1065 = vmatpush1.msra.mxu0 0.0
  %1066 = vmatprep.subr.mxu0 0.0
  %1067 = vmatpush1.msra.mxu0 0.0
  %1068 = vmatprep.subr.mxu0 0.0
  %1069 = vmatpush1.msra.mxu0 0.0
  %1070 = vmatprep.subr.mxu0 0.0
  %1071 = vmatpush1.msra.mxu0 0.0
  %1072 = vmatprep.subr.mxu0 0.0
  %1073 = vmatpush1.msra.mxu0 0.0
  %1074 = vmatprep.subr.mxu0 0.0
  %1075 = vmatpush1.msra.mxu0 0.0
  %1076 = vmatprep.subr.mxu0 0.0
  %1077 = vmatpush1.msra.mxu0 0.0
  %1078 = vmatprep.subr.mxu0 0.0
  %1079 = vmatpush1.msra.mxu0 0.0
  %1080 = vmatprep.subr.mxu0 0.0
  %1081 = vmatpush1.msra.mxu0 0.0
  %1082 = vmatprep.subr.mxu0 0.0
  %1083 = vmatpush1.msra.mxu0 0.0
  %1084 = vmatprep.subr.mxu0 0.0
  %1085 = vmatpush1.msra.mxu0 0.0
  %1086 = vmatprep.subr.mxu0 0.0
  %1087 = vmatpush1.msra.mxu0 0.0
  %1088 = vmatprep.mubr.f32.mxu0 0.0
  %1089 = vmatmul.mubr.f32.gmra.mrb[0].mxu0 %v1001
  %v1090 = vpop.f32.mrb[0].mxu0
  %v1091 = vadd.f32 %v998, %v1090
  %v1092 = vpop.f32.mrb[0].mxu0
  %1093 = vmatprep.mubr.f32.mxu0 0.0
  %1094 = vmatmul.mubr.f32.gmra.mrb[0].mxu0 %v1004
  %v1095 = vpop.f32.mrb[0].mxu0
  %v1096 = vadd.f32 %v998, %v1095
  %v1097 = vpop.f32.mrb[0].mxu0
  %1098 = vmatprep.mubr.f32.mxu0 0.0
  %1099 = vmatmul.mubr.f32.gmra.mrb[0].mxu0 %v1007
  %v1100 = vpop.f32.mrb[0].mxu0
  %v1101 = vadd.f32 %v998, %v1100
  %v1102 = vpop.f32.mrb[0].mxu0
  %1103 = vmatprep.mubr.f32.mxu0 0.0
  %1104 = vmatmul.mubr.f32.gmra.mrb[0].mxu0 %v1010
  %v1105 = vpop.f32.mrb[0].mxu0
  %v1106 = vadd.f32 %v998, %v1105
  %v1107 = vpop.f32.mrb[0].mxu0
  %1108 = vmatprep.mubr.f32.mxu0 0.0
  %1109 = vmatmul.mubr.f32.gmra.mrb[0].mxu0 %v1013
  %v1110 = vpop.f32.mrb[0].mxu0
  %v1111 = vadd.f32 %v998, %v1110
  %v1112 = vpop.f32.mrb[0].mxu0
  %1113 = vmatprep.mubr.f32.mxu0 0.0
  %1114 = vmatmul.mubr.f32.gmra.mrb[0].mxu0 %v1016
  %v1115 = vpop.f32.mrb[0].mxu0
  %v1116 = vadd.f32 %v998, %v1115
  %v1117 = vpop.f32.mrb[0].mxu0
  %1118 = vmatprep.mubr.f32.mxu0 0.0
  %1119 = vmatmul.mubr.f32.gmra.mrb[0].mxu0 %v1019
  %v1120 = vpop.f32.mrb[0].mxu0
  %v1121 = vadd.f32 %v998, %v1120
  %v1122 = vpop.f32.mrb[0].mxu0
  %1123 = vmatprep.mubr.f32.mxu0 0.0
  %1124 = vmatmul.mubr.f32.gmra.mrb[0].mxu0 %v1022
  %v1125 = vpop.f32.mrb[0].mxu0
  %v1126 = vadd.f32 %v998, %v1125
  %v1127 = vpop.f32.mrb[0].mxu0
  %1128 = vdwg.mxu0
  %1129 = vst.msk [vmem:[%s11] sm:$0xff] %vm75, %v1091
  %1130 = vst.msk [vmem:[%s11 + $0x8] sm:$0xff] %vm75, %v1096
  %1131 = vst.msk [vmem:[%s11 + $0x10] sm:$0xff] %vm75, %v1101
  %1132 = vst.msk [vmem:[%s11 + $0x18] sm:$0xff] %vm75, %v1106
  %1133 = vst.msk [vmem:[%s11 + $0x20] sm:$0xff] %vm75, %v1111
  %1134 = vst.msk [vmem:[%s11 + $0x28] sm:$0xff] %vm75, %v1116
  %1135 = vst.msk [vmem:[%s11 + $0x30] sm:$0xff] %vm75, %v1121
  %1136 = vst.msk [vmem:[%s11 + $0x38] sm:$0xff] %vm75, %v1126
  // Predicated region
  $region46: #{tpu_custom_call.1} parent=0 // pred_check
    _
  $region47: #{tpu_custom_call.1} parent=0 // pred_check_branch
    %1138 = sbr.rel (0) target = $region49
  $region48: #{tpu_custom_call.1} parent=0 // pred_region
    _
  $region49: #{tpu_custom_call.1} parent=0 // pred_fallthru
    _
  // Predicated region
  $region50: #{tpu_custom_call.1} parent=0 // pred_check
    _
  $region51: #{tpu_custom_call.1} parent=0 // pred_check_branch
    %1140 = sbr.rel (0) target = $region53
  $region52: #{tpu_custom_call.1} parent=0 // pred_region
    _
  $region53: #{tpu_custom_call.1} parent=0 // pred_fallthru
    _

</llo_original>
